<compile_context>
chip_gen: v5e
topology: v5e:2x2
jax: 0.10.0
libtpu: 0.0.40
codegen_flags: <defaults>
</compile_context>

<pallas_src>
import functools

import jax
import jax.numpy as jnp
from jax.experimental import pallas as pl
from jax.experimental.pallas import tpu as pltpu


def _round_up(n: int, m: int) -> int:
    return ((n + m - 1) // m) * m


def fc_net_kernel(x_ref, w1_ref, b1_ref, w2_ref, b2_ref, w3_ref, b3_ref, o_ref):
    # x_ref: (TB, IN_PAD) bf16; weights bf16; biases f32; o_ref: (TB, OUT_PAD) f32.
    x = x_ref[...]
    h1 = jnp.dot(x, w1_ref[...], preferred_element_type=jnp.float32)
    h1 = jnp.maximum(h1 + b1_ref[...], 0.0)                       # f32 bias/ReLU (VPU)
    h2 = jnp.dot(h1.astype(jnp.bfloat16), w2_ref[...],
                 preferred_element_type=jnp.float32)
    h2 = jnp.maximum(h2 + b2_ref[...], 0.0)
    o = jnp.dot(h2.astype(jnp.bfloat16), w3_ref[...],
                preferred_element_type=jnp.float32)
    o_ref[...] = o + b3_ref[...]


@functools.partial(jax.jit, static_argnames=("block_b",))
def fc_net_forward(x, params, *, block_b: int = 256):
    w1, b1, w2, b2, w3, b3 = params
    B, in_dim = x.shape
    h1_dim = w1.shape[1]          # 256
    h2_dim = w2.shape[1]          # 512
    out_dim = w3.shape[1]         # 51 / 57 / 31

    # Lane-aligned (multiple-of-128) padded feature dims.
    in_pad = _round_up(in_dim, 128)     # 190 -> 256
    out_pad = _round_up(out_dim, 128)   # 51  -> 128

    # Batch tile: multiple of 8 sublanes, capped at block_b; pad B to a whole number of tiles.
    tb = min(block_b, _round_up(B, 8))
    b_pad = _round_up(B, tb)
    grid = (b_pad // tb,)

    # Pad + cast once in the wrapper (zero rows/cols are exact no-ops for the matmuls).
    x_p = jnp.pad(x, ((0, b_pad - B), (0, in_pad - in_dim))).astype(jnp.bfloat16)
    w1_p = jnp.pad(w1, ((0, in_pad - in_dim), (0, 0))).astype(jnp.bfloat16)
    w2_p = w2.astype(jnp.bfloat16)
    w3_p = jnp.pad(w3, ((0, 0), (0, out_pad - out_dim))).astype(jnp.bfloat16)
    b1_p = b1.astype(jnp.float32)
    b2_p = b2.astype(jnp.float32)
    b3_p = jnp.pad(b3, ((0, 0), (0, out_pad - out_dim))).astype(jnp.float32)

    const = lambda i: (0, 0)    # weights/biases: same block every grid step (VMEM-resident)

    flops = 2 * b_pad * (in_pad * h1_dim + h1_dim * h2_dim + h2_dim * out_pad)
    bytes_accessed = (
        x_p.size * 2                                         # bf16 activations in
        + (w1_p.size + w2_p.size + w3_p.size) * 2            # bf16 weights
        + (b1_p.size + b2_p.size + b3_p.size) * 4            # f32 biases
        + b_pad * out_pad * 4                                 # f32 output
    )

    out_padded = pl.pallas_call(
        fc_net_kernel,
        out_shape=jax.ShapeDtypeStruct((b_pad, out_pad), jnp.float32),
        grid=grid,
        in_specs=[
            pl.BlockSpec((tb, in_pad), lambda i: (i, 0)),     # x tile, pipelined
            pl.BlockSpec((in_pad, h1_dim), const),            # w1
            pl.BlockSpec((1, h1_dim), const),                 # b1
            pl.BlockSpec((h1_dim, h2_dim), const),            # w2
            pl.BlockSpec((1, h2_dim), const),                 # b2
            pl.BlockSpec((h2_dim, out_pad), const),           # w3
            pl.BlockSpec((1, out_pad), const),                # b3
        ],
        out_specs=pl.BlockSpec((tb, out_pad), lambda i: (i, 0)),
        compiler_params=pltpu.CompilerParams(
            dimension_semantics=("parallel",),                # shard batch across TCs (v7x)
        ),
        cost_estimate=pl.CostEstimate(
            flops=flops, transcendentals=0, bytes_accessed=bytes_accessed
        ),
    )(x_p, w1_p, b1_p, w2_p, b2_p, w3_p, b3_p)

    return out_padded[:B, :out_dim]


def init_params(key, dataset_name="VG"):
    if dataset_name == "PSG":
        out_dim = 57
    elif dataset_name == "OID":
        out_dim = 31
    else:
        out_dim = 51
    dims = [(190, 256), (256, 512), (512, out_dim)]
    params = []
    for fan_in, fan_out in dims:
        kw, kb, key = jax.random.split(key, 3)
        bound = 1.0 / jnp.sqrt(fan_in)  # mimic PyTorch Linear default init range
        w = jax.random.uniform(kw, (fan_in, fan_out), jnp.float32, -bound, bound)
        b = jax.random.uniform(kb, (1, fan_out), jnp.float32, -bound, bound)
        params += [w, b]
    return params


def fc_net_reference(x, params):
    """Reference mirroring the kernel's bf16-weight / f32-accumulate numerics."""
    w1, b1, w2, b2, w3, b3 = params
    f32 = jnp.float32
    bf16 = jnp.bfloat16
    hp = jax.lax.Precision.HIGHEST
    xr = x.astype(bf16).astype(f32)
    h1 = jnp.maximum(jnp.dot(xr, w1.astype(bf16).astype(f32), precision=hp) + b1, 0.0)
    h1 = h1.astype(bf16).astype(f32)
    h2 = jnp.maximum(jnp.dot(h1, w2.astype(bf16).astype(f32), precision=hp) + b2, 0.0)
    h2 = h2.astype(bf16).astype(f32)
    return jnp.dot(h2, w3.astype(bf16).astype(f32), precision=hp) + b3


if __name__ == "__main__":
    key = jax.random.PRNGKey(0)
    kx, kp = jax.random.split(key)
    B = 8
    x = jax.random.normal(kx, (B, 190), jnp.float32)
    params = init_params(kp, dataset_name="VG")  # fc3: 512 -> 51

    out = fc_net_forward(x, params)
    out = jax.block_until_ready(out)

    ref = fc_net_reference(x, params)
    assert out.shape == (B, 51), out.shape
    assert jnp.allclose(out, ref, atol=2e-3, rtol=2e-3), "mismatch vs reference"
    print("KERNEL_OK")
</pallas_src>

<mosaic_0001>
module attributes {stable_mosaic.version = 11 : i64} {
  func.func @fc_net_kernel(%arg0: i32, %arg1: memref<8x256xbf16, #tpu.memory_space<vmem>>, %arg2: memref<256x256xbf16, #tpu.memory_space<vmem>>, %arg3: memref<1x256xf32, #tpu.memory_space<vmem>>, %arg4: memref<256x512xbf16, #tpu.memory_space<vmem>>, %arg5: memref<1x512xf32, #tpu.memory_space<vmem>>, %arg6: memref<512x128xbf16, #tpu.memory_space<vmem>>, %arg7: memref<1x128xf32, #tpu.memory_space<vmem>>, %arg8: memref<8x128xf32, #tpu.memory_space<vmem>>) attributes {dimension_semantics = [#tpu.dimension_semantics<parallel>], iteration_bounds = array<i64: 1>, scalar_prefetch = 0 : i64, scratch_operands = 0 : i64, tpu.core_type = #tpu.core_type<tc>, window_params = [{transform_indices = @transform_0, window_bounds = array<i64: 8, 256>}, {pipeline_mode = #tpu.pipeline_mode<synchronous>, transform_indices = @transform_1, window_bounds = array<i64: 256, 256>}, {pipeline_mode = #tpu.pipeline_mode<synchronous>, transform_indices = @transform_2, window_bounds = array<i64: 1, 256>}, {pipeline_mode = #tpu.pipeline_mode<synchronous>, transform_indices = @transform_3, window_bounds = array<i64: 256, 512>}, {pipeline_mode = #tpu.pipeline_mode<synchronous>, transform_indices = @transform_4, window_bounds = array<i64: 1, 512>}, {pipeline_mode = #tpu.pipeline_mode<synchronous>, transform_indices = @transform_5, window_bounds = array<i64: 512, 128>}, {pipeline_mode = #tpu.pipeline_mode<synchronous>, transform_indices = @transform_6, window_bounds = array<i64: 1, 128>}, {transform_indices = @transform_7, window_bounds = array<i64: 8, 128>}]} {
    %c0 = arith.constant 0 : index
    %c0_0 = arith.constant 0 : index
    %0 = vector.load %arg1[%c0, %c0_0] : memref<8x256xbf16, #tpu.memory_space<vmem>>, vector<8x256xbf16>
    %c0_1 = arith.constant 0 : index
    %c0_2 = arith.constant 0 : index
    %1 = vector.load %arg2[%c0_1, %c0_2] : memref<256x256xbf16, #tpu.memory_space<vmem>>, vector<256x256xbf16>
    %cst = arith.constant dense<0.000000e+00> : vector<8x256xf32>
    %2 = tpu.matmul %0, %1, %cst {dimension_numbers = #tpu.dot_dimension_numbers<[1], [0], [0], [1], [0, 0, 1, 1], [], []>} : vector<8x256xbf16>, vector<256x256xbf16>, vector<8x256xf32> -> vector<8x256xf32>
    %c0_3 = arith.constant 0 : index
    %c0_4 = arith.constant 0 : index
    %3 = vector.load %arg3[%c0_3, %c0_4] : memref<1x256xf32, #tpu.memory_space<vmem>>, vector<1x256xf32>
    %4 = vector.broadcast %3 : vector<1x256xf32> to vector<8x256xf32>
    %5 = arith.addf %2, %4 : vector<8x256xf32>
    %cst_5 = arith.constant 0.000000e+00 : f32
    %6 = vector.broadcast %cst_5 : f32 to vector<8x256xf32>
    %7 = arith.maximumf %5, %6 : vector<8x256xf32>
    %8 = arith.truncf %7 : vector<8x256xf32> to vector<8x256xbf16>
    %c0_6 = arith.constant 0 : index
    %c0_7 = arith.constant 0 : index
    %9 = vector.load %arg4[%c0_6, %c0_7] : memref<256x512xbf16, #tpu.memory_space<vmem>>, vector<256x512xbf16>
    %cst_8 = arith.constant dense<0.000000e+00> : vector<8x512xf32>
    %10 = tpu.matmul %8, %9, %cst_8 {dimension_numbers = #tpu.dot_dimension_numbers<[1], [0], [0], [1], [0, 0, 1, 1], [], []>} : vector<8x256xbf16>, vector<256x512xbf16>, vector<8x512xf32> -> vector<8x512xf32>
    %c0_9 = arith.constant 0 : index
    %c0_10 = arith.constant 0 : index
    %11 = vector.load %arg5[%c0_9, %c0_10] : memref<1x512xf32, #tpu.memory_space<vmem>>, vector<1x512xf32>
    %12 = vector.broadcast %11 : vector<1x512xf32> to vector<8x512xf32>
    %13 = arith.addf %10, %12 : vector<8x512xf32>
    %cst_11 = arith.constant 0.000000e+00 : f32
    %14 = vector.broadcast %cst_11 : f32 to vector<8x512xf32>
    %15 = arith.maximumf %13, %14 : vector<8x512xf32>
    %16 = arith.truncf %15 : vector<8x512xf32> to vector<8x512xbf16>
    %c0_12 = arith.constant 0 : index
    %c0_13 = arith.constant 0 : index
    %17 = vector.load %arg6[%c0_12, %c0_13] : memref<512x128xbf16, #tpu.memory_space<vmem>>, vector<512x128xbf16>
    %cst_14 = arith.constant dense<0.000000e+00> : vector<8x128xf32>
    %18 = tpu.matmul %16, %17, %cst_14 {dimension_numbers = #tpu.dot_dimension_numbers<[1], [0], [0], [1], [0, 0, 1, 1], [], []>} : vector<8x512xbf16>, vector<512x128xbf16>, vector<8x128xf32> -> vector<8x128xf32>
    %c0_15 = arith.constant 0 : index
    %c0_16 = arith.constant 0 : index
    %19 = vector.load %arg7[%c0_15, %c0_16] : memref<1x128xf32, #tpu.memory_space<vmem>>, vector<1x128xf32>
    %20 = vector.broadcast %19 : vector<1x128xf32> to vector<8x128xf32>
    %21 = arith.addf %18, %20 : vector<8x128xf32>
    %c0_17 = arith.constant 0 : index
    %c0_18 = arith.constant 0 : index
    %22 = vector.load %arg8[%c0_17, %c0_18] : memref<8x128xf32, #tpu.memory_space<vmem>>, vector<8x128xf32>
    tpu.vector_store %arg8[%c0_17, %c0_18], %21 {strides = array<i32>} : memref<8x128xf32, #tpu.memory_space<vmem>>, vector<8x128xf32>,
    return
  }
  func.func @transform_0(%arg0: i32) -> (i32, i32) {
    %c0_i32 = arith.constant 0 : i32
    %c0_i32_0 = arith.constant 0 : i32
    return %arg0, %c0_i32 : i32, i32
  }
  func.func @transform_1(%arg0: i32) -> (i32, i32) {
    %c0_i32 = arith.constant 0 : i32
    %c0_i32_0 = arith.constant 0 : i32
    %c0_i32_1 = arith.constant 0 : i32
    return %c0_i32, %c0_i32_0 : i32, i32
  }
  func.func @transform_2(%arg0: i32) -> (i32, i32) {
    %c0_i32 = arith.constant 0 : i32
    %c0_i32_0 = arith.constant 0 : i32
    %c0_i32_1 = arith.constant 0 : i32
    return %c0_i32, %c0_i32_0 : i32, i32
  }
  func.func @transform_3(%arg0: i32) -> (i32, i32) {
    %c0_i32 = arith.constant 0 : i32
    %c0_i32_0 = arith.constant 0 : i32
    %c0_i32_1 = arith.constant 0 : i32
    return %c0_i32, %c0_i32_0 : i32, i32
  }
  func.func @transform_4(%arg0: i32) -> (i32, i32) {
    %c0_i32 = arith.constant 0 : i32
    %c0_i32_0 = arith.constant 0 : i32
    %c0_i32_1 = arith.constant 0 : i32
    return %c0_i32, %c0_i32_0 : i32, i32
  }
  func.func @transform_5(%arg0: i32) -> (i32, i32) {
    %c0_i32 = arith.constant 0 : i32
    %c0_i32_0 = arith.constant 0 : i32
    %c0_i32_1 = arith.constant 0 : i32
    return %c0_i32, %c0_i32_0 : i32, i32
  }
  func.func @transform_6(%arg0: i32) -> (i32, i32) {
    %c0_i32 = arith.constant 0 : i32
    %c0_i32_0 = arith.constant 0 : i32
    %c0_i32_1 = arith.constant 0 : i32
    return %c0_i32, %c0_i32_0 : i32, i32
  }
  func.func @transform_7(%arg0: i32) -> (i32, i32) {
    %c0_i32 = arith.constant 0 : i32
    %c0_i32_0 = arith.constant 0 : i32
    return %arg0, %c0_i32 : i32, i32
  }
}

</mosaic_0001>

<llo_original>
// kernel: fc_net_forward.1
$region0: #{fc_net_forward.1}
  #allocation0 [shape = 'u32[]', space=smem, size = 0x4, offset = 0x4, fixed_abs, tag = 'smem constant byte address 0x4 - core index']
  #allocation1 [shape = 'u32[72,128]{1,0:T(1,128)}', space=vmem, size = 0x9000, scoped, tag = 'internal scratch']
  %s0 = inlined_call_operand.vmem [shape: bf16[8,256], index: 0, kind: input, shape index: {}]
  %s1 = inlined_call_operand.vmem [shape: bf16[256,256], index: 1, kind: input, shape index: {}]
  %s2 = inlined_call_operand.vmem [shape: f32[1,256], index: 2, kind: input, shape index: {}]
  %s3 = inlined_call_operand.vmem [shape: bf16[256,512], index: 3, kind: input, shape index: {}]
  %s4 = inlined_call_operand.vmem [shape: f32[1,512], index: 4, kind: input, shape index: {}]
  %s5 = inlined_call_operand.vmem [shape: bf16[512,128], index: 5, kind: input, shape index: {}]
  %s6 = inlined_call_operand.vmem [shape: f32[1,128], index: 6, kind: input, shape index: {}]
  %s7 = inlined_call_operand.hbm [shape: f32[8,128], index: 7, kind: output, shape index: {}]
  %s8 = sld [smem:[#allocation0]]
  $region38: #{fc_net_forward.1} parent=0
    _
  %s10 = ssub.s32 1, %s8
  %s11 = scalar_select 0, %s10, %s8
  $region1: #{fc_net_forward.1} parent=0
    #allocation2 [shape = 'u8[4096]{0}', space=vmem, size = 0x1000, scoped, tag = 'output window, operand 0, single buffered']
    #allocation3 [shape = 's32[1]{0}', space=sflag, size = 0x4, scoped, tag = 'scoped memory for fc_net_forward.1']
    %12 = vsyncpa [#allocation3], 0
    // Predicated region
    $region2: #{fc_net_forward.1} parent=1 // pred_check
      _
    $region3: #{fc_net_forward.1} parent=1 // pred_check_branch
      %14 = sbr.rel (0) target = $region5
    $region4: #{fc_net_forward.1} parent=1 // pred_region
      _
    $region5: #{fc_net_forward.1} parent=1 // pred_fallthru
      _
    // Predicated region
    $region6: #{fc_net_forward.1} parent=1 // pred_check
      _
    $region7: #{fc_net_forward.1} parent=1 // pred_check_branch
      %16 = sbr.rel (0) target = $region9
    $region8: #{fc_net_forward.1} parent=1 // pred_region
      _
    $region9: #{fc_net_forward.1} parent=1 // pred_fallthru
      _
    // Predicated region
    $region10: #{fc_net_forward.1} parent=1 // pred_check
      _
    $region11: #{fc_net_forward.1} parent=1 // pred_check_branch
      %18 = sbr.rel (0) target = $region13
    $region12: #{fc_net_forward.1} parent=1 // pred_region
      _
    $region13: #{fc_net_forward.1} parent=1 // pred_fallthru
      _
    // Predicated region
    $region14: #{fc_net_forward.1} parent=1 // pred_check
      _
    $region15: #{fc_net_forward.1} parent=1 // pred_check_branch
      %20 = sbr.rel (0) target = $region17
    $region16: #{fc_net_forward.1} parent=1 // pred_region
      _
    $region17: #{fc_net_forward.1} parent=1 // pred_fallthru
      _
    // Predicated region
    $region18: #{fc_net_forward.1} parent=1 // pred_check
      _
    $region19: #{fc_net_forward.1} parent=1 // pred_check_branch
      %22 = sbr.rel (0) target = $region21
    $region20: #{fc_net_forward.1} parent=1 // pred_region
      _
    $region21: #{fc_net_forward.1} parent=1 // pred_fallthru
      _
    // Predicated region
    $region22: #{fc_net_forward.1} parent=1 // pred_check
      _
    $region23: #{fc_net_forward.1} parent=1 // pred_check_branch
      %24 = sbr.rel (0) target = $region25
    $region24: #{fc_net_forward.1} parent=1 // pred_region
      _
    $region25: #{fc_net_forward.1} parent=1 // pred_fallthru
      _
    // Predicated region
    $region26: #{fc_net_forward.1} parent=1 // pred_check
      _
    $region27: #{fc_net_forward.1} parent=1 // pred_check_branch
      %26 = sbr.rel (0) target = $region29
    $region28: #{fc_net_forward.1} parent=1 // pred_region
      _
    $region29: #{fc_net_forward.1} parent=1 // pred_fallthru
      _
    %v27 = vld [vmem:[%s0] sm:$0xff]
    %v28 = vld [vmem:[%s1] sm:$0xff]
    %v29 = vld [vmem:[%s1 + $0x8] sm:$0xff]
    %v30 = vld [vmem:[%s1 + $0x10] sm:$0xff]
    %v31 = vld [vmem:[%s1 + $0x18] sm:$0xff]
    %v32 = vld [vmem:[%s1 + $0x20] sm:$0xff]
    %v33 = vld [vmem:[%s1 + $0x28] sm:$0xff]
    %v34 = vld [vmem:[%s1 + $0x30] sm:$0xff]
    %v35 = vld [vmem:[%s1 + $0x38] sm:$0xff]
    %v36 = vld [vmem:[%s1 + $0x40] sm:$0xff]
    %v37 = vld [vmem:[%s1 + $0x48] sm:$0xff]
    %v38 = vld [vmem:[%s1 + $0x50] sm:$0xff]
    %v39 = vld [vmem:[%s1 + $0x58] sm:$0xff]
    %v40 = vld [vmem:[%s1 + $0x60] sm:$0xff]
    %v41 = vld [vmem:[%s1 + $0x68] sm:$0xff]
    %v42 = vld [vmem:[%s1 + $0x70] sm:$0xff]
    %v43 = vld [vmem:[%s1 + $0x78] sm:$0xff]
    %v44 = vld [vmem:[%s1 + $0x80] sm:$0xff]
    %v45 = vld [vmem:[%s1 + $0x88] sm:$0xff]
    %v46 = vld [vmem:[%s1 + $0x90] sm:$0xff]
    %v47 = vld [vmem:[%s1 + $0x98] sm:$0xff]
    %v48 = vld [vmem:[%s1 + $0xa0] sm:$0xff]
    %v49 = vld [vmem:[%s1 + $0xa8] sm:$0xff]
    %v50 = vld [vmem:[%s1 + $0xb0] sm:$0xff]
    %v51 = vld [vmem:[%s1 + $0xb8] sm:$0xff]
    %v52 = vld [vmem:[%s1 + $0xc0] sm:$0xff]
    %v53 = vld [vmem:[%s1 + $0xc8] sm:$0xff]
    %v54 = vld [vmem:[%s1 + $0xd0] sm:$0xff]
    %v55 = vld [vmem:[%s1 + $0xd8] sm:$0xff]
    %v56 = vld [vmem:[%s1 + $0xe0] sm:$0xff]
    %v57 = vld [vmem:[%s1 + $0xe8] sm:$0xff]
    %v58 = vld [vmem:[%s1 + $0xf0] sm:$0xff]
    %v59 = vld [vmem:[%s1 + $0xf8] sm:$0xff]
    %v60 = vld [vmem:[%s2] sm:$0x3]
    %v62 = vperm.slane %v60, 0
    %v63 = vperm.slane %v60, 1
    %v67 = vunpack.c.l.b16 %v27
    %v68 = vunpack.c.h.b16 %v27
    %v69 = vpack.c.b16 %v67, %v67
    %v70 = vpack.c.b16 %v68, %v68
    %v105 = vunpack.c.l.b16 %v28
    %v106 = vunpack.c.h.b16 %v28
    %v107 = vunpack.c.l.b16 %v29
    %v108 = vunpack.c.h.b16 %v29
    %v109 = vunpack.c.l.b16 %v30
    %v110 = vunpack.c.h.b16 %v30
    %v111 = vunpack.c.l.b16 %v31
    %v112 = vunpack.c.h.b16 %v31
    %v113 = vunpack.c.l.b16 %v32
    %v114 = vunpack.c.h.b16 %v32
    %v115 = vunpack.c.l.b16 %v33
    %v116 = vunpack.c.h.b16 %v33
    %v117 = vunpack.c.l.b16 %v34
    %v118 = vunpack.c.h.b16 %v34
    %v119 = vunpack.c.l.b16 %v35
    %v120 = vunpack.c.h.b16 %v35
    %v121 = vunpack.c.l.b16 %v36
    %v122 = vunpack.c.h.b16 %v36
    %v123 = vunpack.c.l.b16 %v37
    %v124 = vunpack.c.h.b16 %v37
    %v125 = vunpack.c.l.b16 %v38
    %v126 = vunpack.c.h.b16 %v38
    %v127 = vunpack.c.l.b16 %v39
    %v128 = vunpack.c.h.b16 %v39
    %v129 = vunpack.c.l.b16 %v40
    %v130 = vunpack.c.h.b16 %v40
    %v131 = vunpack.c.l.b16 %v41
    %v132 = vunpack.c.h.b16 %v41
    %v133 = vunpack.c.l.b16 %v42
    %v134 = vunpack.c.h.b16 %v42
    %v135 = vunpack.c.l.b16 %v43
    %v136 = vunpack.c.h.b16 %v43
    %v137 = vunpack.c.l.b16 %v44
    %v138 = vunpack.c.h.b16 %v44
    %v139 = vunpack.c.l.b16 %v45
    %v140 = vunpack.c.h.b16 %v45
    %v141 = vunpack.c.l.b16 %v46
    %v142 = vunpack.c.h.b16 %v46
    %v143 = vunpack.c.l.b16 %v47
    %v144 = vunpack.c.h.b16 %v47
    %v145 = vunpack.c.l.b16 %v48
    %v146 = vunpack.c.h.b16 %v48
    %v147 = vunpack.c.l.b16 %v49
    %v148 = vunpack.c.h.b16 %v49
    %v149 = vunpack.c.l.b16 %v50
    %v150 = vunpack.c.h.b16 %v50
    %v151 = vunpack.c.l.b16 %v51
    %v152 = vunpack.c.h.b16 %v51
    %v153 = vunpack.c.l.b16 %v52
    %v154 = vunpack.c.h.b16 %v52
    %v155 = vunpack.c.l.b16 %v53
    %v156 = vunpack.c.h.b16 %v53
    %v157 = vunpack.c.l.b16 %v54
    %v158 = vunpack.c.h.b16 %v54
    %v159 = vunpack.c.l.b16 %v55
    %v160 = vunpack.c.h.b16 %v55
    %v161 = vunpack.c.l.b16 %v56
    %v162 = vunpack.c.h.b16 %v56
    %v163 = vunpack.c.l.b16 %v57
    %v164 = vunpack.c.h.b16 %v57
    %v165 = vunpack.c.l.b16 %v58
    %v166 = vunpack.c.h.b16 %v58
    %v167 = vunpack.c.l.b16 %v59
    %v168 = vunpack.c.h.b16 %v59
    %v169 = vpack.c.b16 %v107, %v105
    %v170 = vpack.c.b16 %v108, %v106
    %v171 = vpack.c.b16 %v111, %v109
    %v172 = vpack.c.b16 %v112, %v110
    %v173 = vpack.c.b16 %v115, %v113
    %v174 = vpack.c.b16 %v116, %v114
    %v175 = vpack.c.b16 %v119, %v117
    %v176 = vpack.c.b16 %v120, %v118
    %v177 = vpack.c.b16 %v123, %v121
    %v178 = vpack.c.b16 %v124, %v122
    %v179 = vpack.c.b16 %v127, %v125
    %v180 = vpack.c.b16 %v128, %v126
    %v181 = vpack.c.b16 %v131, %v129
    %v182 = vpack.c.b16 %v132, %v130
    %v183 = vpack.c.b16 %v135, %v133
    %v184 = vpack.c.b16 %v136, %v134
    %v185 = vpack.c.b16 %v139, %v137
    %v186 = vpack.c.b16 %v140, %v138
    %v187 = vpack.c.b16 %v143, %v141
    %v188 = vpack.c.b16 %v144, %v142
    %v189 = vpack.c.b16 %v147, %v145
    %v190 = vpack.c.b16 %v148, %v146
    %v191 = vpack.c.b16 %v151, %v149
    %v192 = vpack.c.b16 %v152, %v150
    %v193 = vpack.c.b16 %v155, %v153
    %v194 = vpack.c.b16 %v156, %v154
    %v195 = vpack.c.b16 %v159, %v157
    %v196 = vpack.c.b16 %v160, %v158
    %v197 = vpack.c.b16 %v163, %v161
    %v198 = vpack.c.b16 %v164, %v162
    %v199 = vpack.c.b16 %v167, %v165
    %v200 = vpack.c.b16 %v168, %v166
    %233 = vmatpush.bf16.msra.mxu0 %v183
    %234 = vmatpush.bf16.msra.mxu0 %v181
    %235 = vmatpush.bf16.msra.mxu0 %v179
    %236 = vmatpush.bf16.msra.mxu0 %v177
    %237 = vmatpush.bf16.msra.mxu0 %v175
    %238 = vmatpush.bf16.msra.mxu0 %v173
    %239 = vmatpush.bf16.msra.mxu0 %v171
    %240 = vmatpush.bf16.msra.mxu0 %v169
    %241 = vmatmul.bf16.gmra.mxu0 %v69
    %v242 = vpop.f32.mrf.mxu0
    %v243 = vadd.f32 %v62, %v242
    %v244 = vpop.f32.mrf.mxu0
    %245 = vdwg.mxu0
    %246 = vmatpush.bf16.msra.mxu0 %v199
    %247 = vmatpush.bf16.msra.mxu0 %v197
    %248 = vmatpush.bf16.msra.mxu0 %v195
    %249 = vmatpush.bf16.msra.mxu0 %v193
    %250 = vmatpush.bf16.msra.mxu0 %v191
    %251 = vmatpush.bf16.msra.mxu0 %v189
    %252 = vmatpush.bf16.msra.mxu0 %v187
    %253 = vmatpush.bf16.msra.mxu0 %v185
    %254 = vmatmul.bf16.gmra.mxu0 %v70
    %v255 = vpop.f32.mrf.mxu0
    %v256 = vadd.f32 %v243, %v255
    %v257 = vpop.f32.mrf.mxu0
    %258 = vdwg.mxu0
    %259 = vmatpush.bf16.msra.mxu0 %v184
    %260 = vmatpush.bf16.msra.mxu0 %v182
    %261 = vmatpush.bf16.msra.mxu0 %v180
    %262 = vmatpush.bf16.msra.mxu0 %v178
    %263 = vmatpush.bf16.msra.mxu0 %v176
    %264 = vmatpush.bf16.msra.mxu0 %v174
    %265 = vmatpush.bf16.msra.mxu0 %v172
    %266 = vmatpush.bf16.msra.mxu0 %v170
    %267 = vmatmul.bf16.gmra.mxu0 %v69
    %v268 = vpop.f32.mrf.mxu0
    %v269 = vadd.f32 %v63, %v268
    %v270 = vpop.f32.mrf.mxu0
    %271 = vdwg.mxu0
    %272 = vmatpush.bf16.msra.mxu0 %v200
    %273 = vmatpush.bf16.msra.mxu0 %v198
    %274 = vmatpush.bf16.msra.mxu0 %v196
    %275 = vmatpush.bf16.msra.mxu0 %v194
    %276 = vmatpush.bf16.msra.mxu0 %v192
    %277 = vmatpush.bf16.msra.mxu0 %v190
    %278 = vmatpush.bf16.msra.mxu0 %v188
    %279 = vmatpush.bf16.msra.mxu0 %v186
    %280 = vmatmul.bf16.gmra.mxu0 %v70
    %v281 = vpop.f32.mrf.mxu0
    %v282 = vadd.f32 %v269, %v281
    %v283 = vpop.f32.mrf.mxu0
    %284 = vdwg.mxu0
    %v285 = vmax.f32 %v256, 0.0
    %v286 = vmax.f32 %v282, 0.0
    %v287 = vpack.c.bf16 %v285, %v285
    %v288 = vpack.c.bf16 %v286, %v286
    %v289 = vld [vmem:[%s3] sm:$0xff]
    %v290 = vld [vmem:[%s3 + $0x8] sm:$0xff]
    %v291 = vld [vmem:[%s3 + $0x10] sm:$0xff]
    %v292 = vld [vmem:[%s3 + $0x18] sm:$0xff]
    %v293 = vld [vmem:[%s3 + $0x20] sm:$0xff]
    %v294 = vld [vmem:[%s3 + $0x28] sm:$0xff]
    %v295 = vld [vmem:[%s3 + $0x30] sm:$0xff]
    %v296 = vld [vmem:[%s3 + $0x38] sm:$0xff]
    %v297 = vld [vmem:[%s3 + $0x40] sm:$0xff]
    %v298 = vld [vmem:[%s3 + $0x48] sm:$0xff]
    %v299 = vld [vmem:[%s3 + $0x50] sm:$0xff]
    %v300 = vld [vmem:[%s3 + $0x58] sm:$0xff]
    %v301 = vld [vmem:[%s3 + $0x60] sm:$0xff]
    %v302 = vld [vmem:[%s3 + $0x68] sm:$0xff]
    %v303 = vld [vmem:[%s3 + $0x70] sm:$0xff]
    %v304 = vld [vmem:[%s3 + $0x78] sm:$0xff]
    %v305 = vld [vmem:[%s3 + $0x80] sm:$0xff]
    %v306 = vld [vmem:[%s3 + $0x88] sm:$0xff]
    %v307 = vld [vmem:[%s3 + $0x90] sm:$0xff]
    %v308 = vld [vmem:[%s3 + $0x98] sm:$0xff]
    %v309 = vld [vmem:[%s3 + $0xa0] sm:$0xff]
    %v310 = vld [vmem:[%s3 + $0xa8] sm:$0xff]
    %v311 = vld [vmem:[%s3 + $0xb0] sm:$0xff]
    %v312 = vld [vmem:[%s3 + $0xb8] sm:$0xff]
    %v313 = vld [vmem:[%s3 + $0xc0] sm:$0xff]
    %v314 = vld [vmem:[%s3 + $0xc8] sm:$0xff]
    %v315 = vld [vmem:[%s3 + $0xd0] sm:$0xff]
    %v316 = vld [vmem:[%s3 + $0xd8] sm:$0xff]
    %v317 = vld [vmem:[%s3 + $0xe0] sm:$0xff]
    %v318 = vld [vmem:[%s3 + $0xe8] sm:$0xff]
    %v319 = vld [vmem:[%s3 + $0xf0] sm:$0xff]
    %v320 = vld [vmem:[%s3 + $0xf8] sm:$0xff]
    %v321 = vld [vmem:[%s3 + $0x100] sm:$0xff]
    %v322 = vld [vmem:[%s3 + $0x108] sm:$0xff]
    %v323 = vld [vmem:[%s3 + $0x110] sm:$0xff]
    %v324 = vld [vmem:[%s3 + $0x118] sm:$0xff]
    %v325 = vld [vmem:[%s3 + $0x120] sm:$0xff]
    %v326 = vld [vmem:[%s3 + $0x128] sm:$0xff]
    %v327 = vld [vmem:[%s3 + $0x130] sm:$0xff]
    %v328 = vld [vmem:[%s3 + $0x138] sm:$0xff]
    %v329 = vld [vmem:[%s3 + $0x140] sm:$0xff]
    %v330 = vld [vmem:[%s3 + $0x148] sm:$0xff]
    %v331 = vld [vmem:[%s3 + $0x150] sm:$0xff]
    %v332 = vld [vmem:[%s3 + $0x158] sm:$0xff]
    %v333 = vld [vmem:[%s3 + $0x160] sm:$0xff]
    %v334 = vld [vmem:[%s3 + $0x168] sm:$0xff]
    %v335 = vld [vmem:[%s3 + $0x170] sm:$0xff]
    %v336 = vld [vmem:[%s3 + $0x178] sm:$0xff]
    %v337 = vld [vmem:[%s3 + $0x180] sm:$0xff]
    %v338 = vld [vmem:[%s3 + $0x188] sm:$0xff]
    %v339 = vld [vmem:[%s3 + $0x190] sm:$0xff]
    %v340 = vld [vmem:[%s3 + $0x198] sm:$0xff]
    %v341 = vld [vmem:[%s3 + $0x1a0] sm:$0xff]
    %v342 = vld [vmem:[%s3 + $0x1a8] sm:$0xff]
    %v343 = vld [vmem:[%s3 + $0x1b0] sm:$0xff]
    %v344 = vld [vmem:[%s3 + $0x1b8] sm:$0xff]
    %v345 = vld [vmem:[%s3 + $0x1c0] sm:$0xff]
    %v346 = vld [vmem:[%s3 + $0x1c8] sm:$0xff]
    %v347 = vld [vmem:[%s3 + $0x1d0] sm:$0xff]
    %v348 = vld [vmem:[%s3 + $0x1d8] sm:$0xff]
    %v349 = vld [vmem:[%s3 + $0x1e0] sm:$0xff]
    %v350 = vld [vmem:[%s3 + $0x1e8] sm:$0xff]
    %v351 = vld [vmem:[%s3 + $0x1f0] sm:$0xff]
    %v352 = vld [vmem:[%s3 + $0x1f8] sm:$0xff]
    %v353 = vld [vmem:[%s4] sm:$0xf]
    %v355 = vperm.slane %v353, 0
    %v356 = vperm.slane %v353, 1
    %v357 = vperm.slane %v353, 2
    %v358 = vperm.slane %v353, 3
    %v427 = vunpack.c.l.b16 %v289
    %v428 = vunpack.c.h.b16 %v289
    %v429 = vunpack.c.l.b16 %v290
    %v430 = vunpack.c.h.b16 %v290
    %v431 = vunpack.c.l.b16 %v291
    %v432 = vunpack.c.h.b16 %v291
    %v433 = vunpack.c.l.b16 %v292
    %v434 = vunpack.c.h.b16 %v292
    %v435 = vunpack.c.l.b16 %v293
    %v436 = vunpack.c.h.b16 %v293
    %v437 = vunpack.c.l.b16 %v294
    %v438 = vunpack.c.h.b16 %v294
    %v439 = vunpack.c.l.b16 %v295
    %v440 = vunpack.c.h.b16 %v295
    %v441 = vunpack.c.l.b16 %v296
    %v442 = vunpack.c.h.b16 %v296
    %v443 = vunpack.c.l.b16 %v297
    %v444 = vunpack.c.h.b16 %v297
    %v445 = vunpack.c.l.b16 %v298
    %v446 = vunpack.c.h.b16 %v298
    %v447 = vunpack.c.l.b16 %v299
    %v448 = vunpack.c.h.b16 %v299
    %v449 = vunpack.c.l.b16 %v300
    %v450 = vunpack.c.h.b16 %v300
    %v451 = vunpack.c.l.b16 %v301
    %v452 = vunpack.c.h.b16 %v301
    %v453 = vunpack.c.l.b16 %v302
    %v454 = vunpack.c.h.b16 %v302
    %v455 = vunpack.c.l.b16 %v303
    %v456 = vunpack.c.h.b16 %v303
    %v457 = vunpack.c.l.b16 %v304
    %v458 = vunpack.c.h.b16 %v304
    %v459 = vunpack.c.l.b16 %v305
    %v460 = vunpack.c.h.b16 %v305
    %v461 = vunpack.c.l.b16 %v306
    %v462 = vunpack.c.h.b16 %v306
    %v463 = vunpack.c.l.b16 %v307
    %v464 = vunpack.c.h.b16 %v307
    %v465 = vunpack.c.l.b16 %v308
    %v466 = vunpack.c.h.b16 %v308
    %v467 = vunpack.c.l.b16 %v309
    %v468 = vunpack.c.h.b16 %v309
    %v469 = vunpack.c.l.b16 %v310
    %v470 = vunpack.c.h.b16 %v310
    %v471 = vunpack.c.l.b16 %v311
    %v472 = vunpack.c.h.b16 %v311
    %v473 = vunpack.c.l.b16 %v312
    %v474 = vunpack.c.h.b16 %v312
    %v475 = vunpack.c.l.b16 %v313
    %v476 = vunpack.c.h.b16 %v313
    %v477 = vunpack.c.l.b16 %v314
    %v478 = vunpack.c.h.b16 %v314
    %v479 = vunpack.c.l.b16 %v315
    %v480 = vunpack.c.h.b16 %v315
    %v481 = vunpack.c.l.b16 %v316
    %v482 = vunpack.c.h.b16 %v316
    %v483 = vunpack.c.l.b16 %v317
    %v484 = vunpack.c.h.b16 %v317
    %v485 = vunpack.c.l.b16 %v318
    %v486 = vunpack.c.h.b16 %v318
    %v487 = vunpack.c.l.b16 %v319
    %v488 = vunpack.c.h.b16 %v319
    %v489 = vunpack.c.l.b16 %v320
    %v490 = vunpack.c.h.b16 %v320
    %v491 = vunpack.c.l.b16 %v321
    %v492 = vunpack.c.h.b16 %v321
    %v493 = vunpack.c.l.b16 %v322
    %v494 = vunpack.c.h.b16 %v322
    %v495 = vunpack.c.l.b16 %v323
    %v496 = vunpack.c.h.b16 %v323
    %v497 = vunpack.c.l.b16 %v324
    %v498 = vunpack.c.h.b16 %v324
    %v499 = vunpack.c.l.b16 %v325
    %v500 = vunpack.c.h.b16 %v325
    %v501 = vunpack.c.l.b16 %v326
    %v502 = vunpack.c.h.b16 %v326
    %v503 = vunpack.c.l.b16 %v327
    %v504 = vunpack.c.h.b16 %v327
    %v505 = vunpack.c.l.b16 %v328
    %v506 = vunpack.c.h.b16 %v328
    %v507 = vunpack.c.l.b16 %v329
    %v508 = vunpack.c.h.b16 %v329
    %v509 = vunpack.c.l.b16 %v330
    %v510 = vunpack.c.h.b16 %v330
    %v511 = vunpack.c.l.b16 %v331
    %v512 = vunpack.c.h.b16 %v331
    %v513 = vunpack.c.l.b16 %v332
    %v514 = vunpack.c.h.b16 %v332
    %v515 = vunpack.c.l.b16 %v333
    %v516 = vunpack.c.h.b16 %v333
    %v517 = vunpack.c.l.b16 %v334
    %v518 = vunpack.c.h.b16 %v334
    %v519 = vunpack.c.l.b16 %v335
    %v520 = vunpack.c.h.b16 %v335
    %v521 = vunpack.c.l.b16 %v336
    %v522 = vunpack.c.h.b16 %v336
    %v523 = vunpack.c.l.b16 %v337
    %v524 = vunpack.c.h.b16 %v337
    %v525 = vunpack.c.l.b16 %v338
    %v526 = vunpack.c.h.b16 %v338
    %v527 = vunpack.c.l.b16 %v339
    %v528 = vunpack.c.h.b16 %v339
    %v529 = vunpack.c.l.b16 %v340
    %v530 = vunpack.c.h.b16 %v340
    %v531 = vunpack.c.l.b16 %v341
    %v532 = vunpack.c.h.b16 %v341
    %v533 = vunpack.c.l.b16 %v342
    %v534 = vunpack.c.h.b16 %v342
    %v535 = vunpack.c.l.b16 %v343
    %v536 = vunpack.c.h.b16 %v343
    %v537 = vunpack.c.l.b16 %v344
    %v538 = vunpack.c.h.b16 %v344
    %v539 = vunpack.c.l.b16 %v345
    %v540 = vunpack.c.h.b16 %v345
    %v541 = vunpack.c.l.b16 %v346
    %v542 = vunpack.c.h.b16 %v346
    %v543 = vunpack.c.l.b16 %v347
    %v544 = vunpack.c.h.b16 %v347
    %v545 = vunpack.c.l.b16 %v348
    %v546 = vunpack.c.h.b16 %v348
    %v547 = vunpack.c.l.b16 %v349
    %v548 = vunpack.c.h.b16 %v349
    %v549 = vunpack.c.l.b16 %v350
    %v550 = vunpack.c.h.b16 %v350
    %v551 = vunpack.c.l.b16 %v351
    %v552 = vunpack.c.h.b16 %v351
    %v553 = vunpack.c.l.b16 %v352
    %v554 = vunpack.c.h.b16 %v352
    %v555 = vpack.c.b16 %v431, %v427
    %v556 = vpack.c.b16 %v432, %v428
    %v557 = vpack.c.b16 %v433, %v429
    %v558 = vpack.c.b16 %v434, %v430
    %v559 = vpack.c.b16 %v439, %v435
    %v560 = vpack.c.b16 %v440, %v436
    %v561 = vpack.c.b16 %v441, %v437
    %v562 = vpack.c.b16 %v442, %v438
    %v563 = vpack.c.b16 %v447, %v443
    %v564 = vpack.c.b16 %v448, %v444
    %v565 = vpack.c.b16 %v449, %v445
    %v566 = vpack.c.b16 %v450, %v446
    %v567 = vpack.c.b16 %v455, %v451
    %v568 = vpack.c.b16 %v456, %v452
    %v569 = vpack.c.b16 %v457, %v453
    %v570 = vpack.c.b16 %v458, %v454
    %v571 = vpack.c.b16 %v463, %v459
    %v572 = vpack.c.b16 %v464, %v460
    %v573 = vpack.c.b16 %v465, %v461
    %v574 = vpack.c.b16 %v466, %v462
    %v575 = vpack.c.b16 %v471, %v467
    %v576 = vpack.c.b16 %v472, %v468
    %v577 = vpack.c.b16 %v473, %v469
    %v578 = vpack.c.b16 %v474, %v470
    %v579 = vpack.c.b16 %v479, %v475
    %v580 = vpack.c.b16 %v480, %v476
    %v581 = vpack.c.b16 %v481, %v477
    %v582 = vpack.c.b16 %v482, %v478
    %v583 = vpack.c.b16 %v487, %v483
    %v584 = vpack.c.b16 %v488, %v484
    %v585 = vpack.c.b16 %v489, %v485
    %v586 = vpack.c.b16 %v490, %v486
    %v587 = vpack.c.b16 %v495, %v491
    %v588 = vpack.c.b16 %v496, %v492
    %v589 = vpack.c.b16 %v497, %v493
    %v590 = vpack.c.b16 %v498, %v494
    %v591 = vpack.c.b16 %v503, %v499
    %v592 = vpack.c.b16 %v504, %v500
    %v593 = vpack.c.b16 %v505, %v501
    %v594 = vpack.c.b16 %v506, %v502
    %v595 = vpack.c.b16 %v511, %v507
    %v596 = vpack.c.b16 %v512, %v508
    %v597 = vpack.c.b16 %v513, %v509
    %v598 = vpack.c.b16 %v514, %v510
    %v599 = vpack.c.b16 %v519, %v515
    %v600 = vpack.c.b16 %v520, %v516
    %v601 = vpack.c.b16 %v521, %v517
    %v602 = vpack.c.b16 %v522, %v518
    %v603 = vpack.c.b16 %v527, %v523
    %v604 = vpack.c.b16 %v528, %v524
    %v605 = vpack.c.b16 %v529, %v525
    %v606 = vpack.c.b16 %v530, %v526
    %v607 = vpack.c.b16 %v535, %v531
    %v608 = vpack.c.b16 %v536, %v532
    %v609 = vpack.c.b16 %v537, %v533
    %v610 = vpack.c.b16 %v538, %v534
    %v611 = vpack.c.b16 %v543, %v539
    %v612 = vpack.c.b16 %v544, %v540
    %v613 = vpack.c.b16 %v545, %v541
    %v614 = vpack.c.b16 %v546, %v542
    %v615 = vpack.c.b16 %v551, %v547
    %v616 = vpack.c.b16 %v552, %v548
    %v617 = vpack.c.b16 %v553, %v549
    %v618 = vpack.c.b16 %v554, %v550
    %683 = vmatpush.bf16.msra.mxu0 %v583
    %684 = vmatpush.bf16.msra.mxu0 %v579
    %685 = vmatpush.bf16.msra.mxu0 %v575
    %686 = vmatpush.bf16.msra.mxu0 %v571
    %687 = vmatpush.bf16.msra.mxu0 %v567
    %688 = vmatpush.bf16.msra.mxu0 %v563
    %689 = vmatpush.bf16.msra.mxu0 %v559
    %690 = vmatpush.bf16.msra.mxu0 %v555
    %691 = vmatmul.bf16.gmra.mxu0 %v287
    %v692 = vpop.f32.mrf.mxu0
    %v693 = vadd.f32 %v355, %v692
    %v694 = vpop.f32.mrf.mxu0
    %695 = vdwg.mxu0
    %696 = vmatpush.bf16.msra.mxu0 %v615
    %697 = vmatpush.bf16.msra.mxu0 %v611
    %698 = vmatpush.bf16.msra.mxu0 %v607
    %699 = vmatpush.bf16.msra.mxu0 %v603
    %700 = vmatpush.bf16.msra.mxu0 %v599
    %701 = vmatpush.bf16.msra.mxu0 %v595
    %702 = vmatpush.bf16.msra.mxu0 %v591
    %703 = vmatpush.bf16.msra.mxu0 %v587
    %704 = vmatmul.bf16.gmra.mxu0 %v288
    %v705 = vpop.f32.mrf.mxu0
    %v706 = vadd.f32 %v693, %v705
    %v707 = vpop.f32.mrf.mxu0
    %708 = vdwg.mxu0
    %709 = vmatpush.bf16.msra.mxu0 %v584
    %710 = vmatpush.bf16.msra.mxu0 %v580
    %711 = vmatpush.bf16.msra.mxu0 %v576
    %712 = vmatpush.bf16.msra.mxu0 %v572
    %713 = vmatpush.bf16.msra.mxu0 %v568
    %714 = vmatpush.bf16.msra.mxu0 %v564
    %715 = vmatpush.bf16.msra.mxu0 %v560
    %716 = vmatpush.bf16.msra.mxu0 %v556
    %717 = vmatmul.bf16.gmra.mxu0 %v287
    %v718 = vpop.f32.mrf.mxu0
    %v719 = vadd.f32 %v356, %v718
    %v720 = vpop.f32.mrf.mxu0
    %721 = vdwg.mxu0
    %722 = vmatpush.bf16.msra.mxu0 %v616
    %723 = vmatpush.bf16.msra.mxu0 %v612
    %724 = vmatpush.bf16.msra.mxu0 %v608
    %725 = vmatpush.bf16.msra.mxu0 %v604
    %726 = vmatpush.bf16.msra.mxu0 %v600
    %727 = vmatpush.bf16.msra.mxu0 %v596
    %728 = vmatpush.bf16.msra.mxu0 %v592
    %729 = vmatpush.bf16.msra.mxu0 %v588
    %730 = vmatmul.bf16.gmra.mxu0 %v288
    %v731 = vpop.f32.mrf.mxu0
    %v732 = vadd.f32 %v719, %v731
    %v733 = vpop.f32.mrf.mxu0
    %734 = vdwg.mxu0
    %735 = vmatpush.bf16.msra.mxu0 %v585
    %736 = vmatpush.bf16.msra.mxu0 %v581
    %737 = vmatpush.bf16.msra.mxu0 %v577
    %738 = vmatpush.bf16.msra.mxu0 %v573
    %739 = vmatpush.bf16.msra.mxu0 %v569
    %740 = vmatpush.bf16.msra.mxu0 %v565
    %741 = vmatpush.bf16.msra.mxu0 %v561
    %742 = vmatpush.bf16.msra.mxu0 %v557
    %743 = vmatmul.bf16.gmra.mxu0 %v287
    %v744 = vpop.f32.mrf.mxu0
    %v745 = vadd.f32 %v357, %v744
    %v746 = vpop.f32.mrf.mxu0
    %747 = vdwg.mxu0
    %748 = vmatpush.bf16.msra.mxu0 %v617
    %749 = vmatpush.bf16.msra.mxu0 %v613
    %750 = vmatpush.bf16.msra.mxu0 %v609
    %751 = vmatpush.bf16.msra.mxu0 %v605
    %752 = vmatpush.bf16.msra.mxu0 %v601
    %753 = vmatpush.bf16.msra.mxu0 %v597
    %754 = vmatpush.bf16.msra.mxu0 %v593
    %755 = vmatpush.bf16.msra.mxu0 %v589
    %756 = vmatmul.bf16.gmra.mxu0 %v288
    %v757 = vpop.f32.mrf.mxu0
    %v758 = vadd.f32 %v745, %v757
    %v759 = vpop.f32.mrf.mxu0
    %760 = vdwg.mxu0
    %761 = vmatpush.bf16.msra.mxu0 %v586
    %762 = vmatpush.bf16.msra.mxu0 %v582
    %763 = vmatpush.bf16.msra.mxu0 %v578
    %764 = vmatpush.bf16.msra.mxu0 %v574
    %765 = vmatpush.bf16.msra.mxu0 %v570
    %766 = vmatpush.bf16.msra.mxu0 %v566
    %767 = vmatpush.bf16.msra.mxu0 %v562
    %768 = vmatpush.bf16.msra.mxu0 %v558
    %769 = vmatmul.bf16.gmra.mxu0 %v287
    %v770 = vpop.f32.mrf.mxu0
    %v771 = vadd.f32 %v358, %v770
    %v772 = vpop.f32.mrf.mxu0
    %773 = vdwg.mxu0
    %774 = vmatpush.bf16.msra.mxu0 %v618
    %775 = vmatpush.bf16.msra.mxu0 %v614
    %776 = vmatpush.bf16.msra.mxu0 %v610
    %777 = vmatpush.bf16.msra.mxu0 %v606
    %778 = vmatpush.bf16.msra.mxu0 %v602
    %779 = vmatpush.bf16.msra.mxu0 %v598
    %780 = vmatpush.bf16.msra.mxu0 %v594
    %781 = vmatpush.bf16.msra.mxu0 %v590
    %782 = vmatmul.bf16.gmra.mxu0 %v288
    %v783 = vpop.f32.mrf.mxu0
    %v784 = vadd.f32 %v771, %v783
    %v785 = vpop.f32.mrf.mxu0
    %786 = vdwg.mxu0
    %v787 = vmax.f32 %v706, 0.0
    %v788 = vmax.f32 %v732, 0.0
    %v789 = vmax.f32 %v758, 0.0
    %v790 = vmax.f32 %v784, 0.0
    %v791 = vpack.c.bf16 %v787, %v787
    %v792 = vpack.c.bf16 %v788, %v788
    %v793 = vpack.c.bf16 %v789, %v789
    %v794 = vpack.c.bf16 %v790, %v790
    %v795 = vld [vmem:[%s5] sm:$0xf]
    %v796 = vld [vmem:[%s5 + $0x4] sm:$0xf]
    %v797 = vld [vmem:[%s5 + $0x8] sm:$0xf]
    %v798 = vld [vmem:[%s5 + $0xc] sm:$0xf]
    %v799 = vld [vmem:[%s5 + $0x10] sm:$0xf]
    %v800 = vld [vmem:[%s5 + $0x14] sm:$0xf]
    %v801 = vld [vmem:[%s5 + $0x18] sm:$0xf]
    %v802 = vld [vmem:[%s5 + $0x1c] sm:$0xf]
    %v803 = vld [vmem:[%s5 + $0x20] sm:$0xf]
    %v804 = vld [vmem:[%s5 + $0x24] sm:$0xf]
    %v805 = vld [vmem:[%s5 + $0x28] sm:$0xf]
    %v806 = vld [vmem:[%s5 + $0x2c] sm:$0xf]
    %v807 = vld [vmem:[%s5 + $0x30] sm:$0xf]
    %v808 = vld [vmem:[%s5 + $0x34] sm:$0xf]
    %v809 = vld [vmem:[%s5 + $0x38] sm:$0xf]
    %v810 = vld [vmem:[%s5 + $0x3c] sm:$0xf]
    %v811 = vld [vmem:[%s5 + $0x40] sm:$0xf]
    %v812 = vld [vmem:[%s5 + $0x44] sm:$0xf]
    %v813 = vld [vmem:[%s5 + $0x48] sm:$0xf]
    %v814 = vld [vmem:[%s5 + $0x4c] sm:$0xf]
    %v815 = vld [vmem:[%s5 + $0x50] sm:$0xf]
    %v816 = vld [vmem:[%s5 + $0x54] sm:$0xf]
    %v817 = vld [vmem:[%s5 + $0x58] sm:$0xf]
    %v818 = vld [vmem:[%s5 + $0x5c] sm:$0xf]
    %v819 = vld [vmem:[%s5 + $0x60] sm:$0xf]
    %v820 = vld [vmem:[%s5 + $0x64] sm:$0xf]
    %v821 = vld [vmem:[%s5 + $0x68] sm:$0xf]
    %v822 = vld [vmem:[%s5 + $0x6c] sm:$0xf]
    %v823 = vld [vmem:[%s5 + $0x70] sm:$0xf]
    %v824 = vld [vmem:[%s5 + $0x74] sm:$0xf]
    %v825 = vld [vmem:[%s5 + $0x78] sm:$0xf]
    %v826 = vld [vmem:[%s5 + $0x7c] sm:$0xf]
    %v827 = vld [vmem:[%s5 + $0x80] sm:$0xf]
    %v828 = vld [vmem:[%s5 + $0x84] sm:$0xf]
    %v829 = vld [vmem:[%s5 + $0x88] sm:$0xf]
    %v830 = vld [vmem:[%s5 + $0x8c] sm:$0xf]
    %v831 = vld [vmem:[%s5 + $0x90] sm:$0xf]
    %v832 = vld [vmem:[%s5 + $0x94] sm:$0xf]
    %v833 = vld [vmem:[%s5 + $0x98] sm:$0xf]
    %v834 = vld [vmem:[%s5 + $0x9c] sm:$0xf]
    %v835 = vld [vmem:[%s5 + $0xa0] sm:$0xf]
    %v836 = vld [vmem:[%s5 + $0xa4] sm:$0xf]
    %v837 = vld [vmem:[%s5 + $0xa8] sm:$0xf]
    %v838 = vld [vmem:[%s5 + $0xac] sm:$0xf]
    %v839 = vld [vmem:[%s5 + $0xb0] sm:$0xf]
    %v840 = vld [vmem:[%s5 + $0xb4] sm:$0xf]
    %v841 = vld [vmem:[%s5 + $0xb8] sm:$0xf]
    %v842 = vld [vmem:[%s5 + $0xbc] sm:$0xf]
    %v843 = vld [vmem:[%s5 + $0xc0] sm:$0xf]
    %v844 = vld [vmem:[%s5 + $0xc4] sm:$0xf]
    %v845 = vld [vmem:[%s5 + $0xc8] sm:$0xf]
    %v846 = vld [vmem:[%s5 + $0xcc] sm:$0xf]
    %v847 = vld [vmem:[%s5 + $0xd0] sm:$0xf]
    %v848 = vld [vmem:[%s5 + $0xd4] sm:$0xf]
    %v849 = vld [vmem:[%s5 + $0xd8] sm:$0xf]
    %v850 = vld [vmem:[%s5 + $0xdc] sm:$0xf]
    %v851 = vld [vmem:[%s5 + $0xe0] sm:$0xf]
    %v852 = vld [vmem:[%s5 + $0xe4] sm:$0xf]
    %v853 = vld [vmem:[%s5 + $0xe8] sm:$0xf]
    %v854 = vld [vmem:[%s5 + $0xec] sm:$0xf]
    %v855 = vld [vmem:[%s5 + $0xf0] sm:$0xf]
    %v856 = vld [vmem:[%s5 + $0xf4] sm:$0xf]
    %v857 = vld [vmem:[%s5 + $0xf8] sm:$0xf]
    %v858 = vld [vmem:[%s5 + $0xfc] sm:$0xf]
    %v859 = vld [vmem:[%s6] sm:$0x1]
    %v861 = vperm.slane %v859, 0
    %v927 = vunpack.c.l.b16 %v795
    %v928 = vunpack.c.l.b16 %v796
    %v929 = vunpack.c.l.b16 %v797
    %v930 = vunpack.c.l.b16 %v798
    %v931 = vunpack.c.l.b16 %v799
    %v932 = vunpack.c.l.b16 %v800
    %v933 = vunpack.c.l.b16 %v801
    %v934 = vunpack.c.l.b16 %v802
    %v935 = vunpack.c.l.b16 %v803
    %v936 = vunpack.c.l.b16 %v804
    %v937 = vunpack.c.l.b16 %v805
    %v938 = vunpack.c.l.b16 %v806
    %v939 = vunpack.c.l.b16 %v807
    %v940 = vunpack.c.l.b16 %v808
    %v941 = vunpack.c.l.b16 %v809
    %v942 = vunpack.c.l.b16 %v810
    %v943 = vunpack.c.l.b16 %v811
    %v944 = vunpack.c.l.b16 %v812
    %v945 = vunpack.c.l.b16 %v813
    %v946 = vunpack.c.l.b16 %v814
    %v947 = vunpack.c.l.b16 %v815
    %v948 = vunpack.c.l.b16 %v816
    %v949 = vunpack.c.l.b16 %v817
    %v950 = vunpack.c.l.b16 %v818
    %v951 = vunpack.c.l.b16 %v819
    %v952 = vunpack.c.l.b16 %v820
    %v953 = vunpack.c.l.b16 %v821
    %v954 = vunpack.c.l.b16 %v822
    %v955 = vunpack.c.l.b16 %v823
    %v956 = vunpack.c.l.b16 %v824
    %v957 = vunpack.c.l.b16 %v825
    %v958 = vunpack.c.l.b16 %v826
    %v959 = vunpack.c.l.b16 %v827
    %v960 = vunpack.c.l.b16 %v828
    %v961 = vunpack.c.l.b16 %v829
    %v962 = vunpack.c.l.b16 %v830
    %v963 = vunpack.c.l.b16 %v831
    %v964 = vunpack.c.l.b16 %v832
    %v965 = vunpack.c.l.b16 %v833
    %v966 = vunpack.c.l.b16 %v834
    %v967 = vunpack.c.l.b16 %v835
    %v968 = vunpack.c.l.b16 %v836
    %v969 = vunpack.c.l.b16 %v837
    %v970 = vunpack.c.l.b16 %v838
    %v971 = vunpack.c.l.b16 %v839
    %v972 = vunpack.c.l.b16 %v840
    %v973 = vunpack.c.l.b16 %v841
    %v974 = vunpack.c.l.b16 %v842
    %v975 = vunpack.c.l.b16 %v843
    %v976 = vunpack.c.l.b16 %v844
    %v977 = vunpack.c.l.b16 %v845
    %v978 = vunpack.c.l.b16 %v846
    %v979 = vunpack.c.l.b16 %v847
    %v980 = vunpack.c.l.b16 %v848
    %v981 = vunpack.c.l.b16 %v849
    %v982 = vunpack.c.l.b16 %v850
    %v983 = vunpack.c.l.b16 %v851
    %v984 = vunpack.c.l.b16 %v852
    %v985 = vunpack.c.l.b16 %v853
    %v986 = vunpack.c.l.b16 %v854
    %v987 = vunpack.c.l.b16 %v855
    %v988 = vunpack.c.l.b16 %v856
    %v989 = vunpack.c.l.b16 %v857
    %v990 = vunpack.c.l.b16 %v858
    %v991 = vpack.c.b16 %v928, %v927
    %v992 = vpack.c.b16 %v930, %v929
    %v993 = vpack.c.b16 %v932, %v931
    %v994 = vpack.c.b16 %v934, %v933
    %v995 = vpack.c.b16 %v936, %v935
    %v996 = vpack.c.b16 %v938, %v937
    %v997 = vpack.c.b16 %v940, %v939
    %v998 = vpack.c.b16 %v942, %v941
    %v999 = vpack.c.b16 %v944, %v943
    %v1000 = vpack.c.b16 %v946, %v945
    %v1001 = vpack.c.b16 %v948, %v947
    %v1002 = vpack.c.b16 %v950, %v949
    %v1003 = vpack.c.b16 %v952, %v951
    %v1004 = vpack.c.b16 %v954, %v953
    %v1005 = vpack.c.b16 %v956, %v955
    %v1006 = vpack.c.b16 %v958, %v957
    %v1007 = vpack.c.b16 %v960, %v959
    %v1008 = vpack.c.b16 %v962, %v961
    %v1009 = vpack.c.b16 %v964, %v963
    %v1010 = vpack.c.b16 %v966, %v965
    %v1011 = vpack.c.b16 %v968, %v967
    %v1012 = vpack.c.b16 %v970, %v969
    %v1013 = vpack.c.b16 %v972, %v971
    %v1014 = vpack.c.b16 %v974, %v973
    %v1015 = vpack.c.b16 %v976, %v975
    %v1016 = vpack.c.b16 %v978, %v977
    %v1017 = vpack.c.b16 %v980, %v979
    %v1018 = vpack.c.b16 %v982, %v981
    %v1019 = vpack.c.b16 %v984, %v983
    %v1020 = vpack.c.b16 %v986, %v985
    %v1021 = vpack.c.b16 %v988, %v987
    %v1022 = vpack.c.b16 %v990, %v989
    %1055 = vmatpush.bf16.msra.mxu0 %v998
    %1056 = vmatpush.bf16.msra.mxu0 %v997
    %1057 = vmatpush.bf16.msra.mxu0 %v996
    %1058 = vmatpush.bf16.msra.mxu0 %v995
    %1059 = vmatpush.bf16.msra.mxu0 %v994
    %1060 = vmatpush.bf16.msra.mxu0 %v993
    %1061 = vmatpush.bf16.msra.mxu0 %v992
    %1062 = vmatpush.bf16.msra.mxu0 %v991
    %1063 = vmatmul.bf16.gmra.mxu0 %v791
    %v1064 = vpop.f32.mrf.mxu0
    %v1065 = vadd.f32 %v861, %v1064
    %v1066 = vpop.f32.mrf.mxu0
    %1067 = vdwg.mxu0
    %1068 = vmatpush.bf16.msra.mxu0 %v1006
    %1069 = vmatpush.bf16.msra.mxu0 %v1005
    %1070 = vmatpush.bf16.msra.mxu0 %v1004
    %1071 = vmatpush.bf16.msra.mxu0 %v1003
    %1072 = vmatpush.bf16.msra.mxu0 %v1002
    %1073 = vmatpush.bf16.msra.mxu0 %v1001
    %1074 = vmatpush.bf16.msra.mxu0 %v1000
    %1075 = vmatpush.bf16.msra.mxu0 %v999
    %1076 = vmatmul.bf16.gmra.mxu0 %v792
    %v1077 = vpop.f32.mrf.mxu0
    %v1078 = vadd.f32 %v1065, %v1077
    %v1079 = vpop.f32.mrf.mxu0
    %1080 = vdwg.mxu0
    %1081 = vmatpush.bf16.msra.mxu0 %v1014
    %1082 = vmatpush.bf16.msra.mxu0 %v1013
    %1083 = vmatpush.bf16.msra.mxu0 %v1012
    %1084 = vmatpush.bf16.msra.mxu0 %v1011
    %1085 = vmatpush.bf16.msra.mxu0 %v1010
    %1086 = vmatpush.bf16.msra.mxu0 %v1009
    %1087 = vmatpush.bf16.msra.mxu0 %v1008
    %1088 = vmatpush.bf16.msra.mxu0 %v1007
    %1089 = vmatmul.bf16.gmra.mxu0 %v793
    %v1090 = vpop.f32.mrf.mxu0
    %v1091 = vadd.f32 %v1078, %v1090
    %v1092 = vpop.f32.mrf.mxu0
    %1093 = vdwg.mxu0
    %1094 = vmatpush.bf16.msra.mxu0 %v1022
    %1095 = vmatpush.bf16.msra.mxu0 %v1021
    %1096 = vmatpush.bf16.msra.mxu0 %v1020
    %1097 = vmatpush.bf16.msra.mxu0 %v1019
    %1098 = vmatpush.bf16.msra.mxu0 %v1018
    %1099 = vmatpush.bf16.msra.mxu0 %v1017
    %1100 = vmatpush.bf16.msra.mxu0 %v1016
    %1101 = vmatpush.bf16.msra.mxu0 %v1015
    %1102 = vmatmul.bf16.gmra.mxu0 %v794
    %v1103 = vpop.f32.mrf.mxu0
    %v1104 = vadd.f32 %v1091, %v1103
    %v1105 = vpop.f32.mrf.mxu0
    %1106 = vdwg.mxu0
    %1107 = vst [vmem:[#allocation2] sm:$0xff] %v1104
    // Predicated region
    $region30: #{fc_net_forward.1} parent=1 // pred_check
      _
    $region31: #{fc_net_forward.1} parent=1 // pred_check_branch
      %1109 = sbr.rel (0) target = $region33
    $region32: #{fc_net_forward.1} parent=1 // pred_region
      %1111 = vsyncadd [#allocation3], 0
      %s1113 = sshll.u32 [#allocation2], 4
      %s1114 = int_to_ptr.vmem [resolvable:$true] %s1113
      %s1115 = sshll.u32 %s7, 4
      %s1116 = int_to_ptr.hbm [resolvable:$true] %s1115
      %1118 = dma.vmem_to_hbm [thread:$0]  %s1114, 128, %s1116, [#allocation3]
    $region33: #{fc_net_forward.1} parent=1 // pred_fallthru
      _
    // Predicated region
    $region34: #{fc_net_forward.1} parent=1 // pred_check
      _
    $region35: #{fc_net_forward.1} parent=1 // pred_check_branch
      %1120 = sbr.rel (0) target = $region37
    $region36: #{fc_net_forward.1} parent=1 // pred_region
      %1122 = dma.done [#allocation3], 128
    $region37: #{fc_net_forward.1} parent=1 // pred_fallthru
      _
    %1123 = vsyncpa [#allocation3], 1

</llo_original>
